<compile_context>
chip_gen: v6e
topology: v6e:2x2x1
jax: 0.10.0
libtpu: 0.0.40
codegen_flags: <defaults>
</compile_context>

<pallas_src>
import jax
import jax.numpy as jnp
import numpy as np
from jax.experimental import pallas as pl
from jax.experimental.pallas import tpu as pltpu


def mapping_kernel(prob_ref, w_ref, out_ref):
    # Single fused dot: matmul + grouped mean are both folded into W.
    out_ref[...] = jnp.dot(
        prob_ref[...], w_ref[...], preferred_element_type=jnp.float32
    ).astype(out_ref.dtype)


def make_label_map(source_num, mapping_num, target_num, dtype=jnp.float32):
    """Exact torch constant: identity in the top-left (mt x mt) block."""
    mt = mapping_num * target_num
    assert mt <= source_num, "identity block must fit (as in the torch module)"
    lm = np.zeros((source_num, mt), dtype=np.float32)
    lm[0:mt, 0:mt] = np.eye(mt, dtype=np.float32)
    return jnp.asarray(lm, dtype=dtype)


def make_mapping_weight(label_map, mapping_num, target_num):
    """Precompute W = label_map @ G / mapping_num  (shape (S, target_num)).

    Kept as the general combined-matrix form (not the identity-slice
    shortcut) so a non-identity label_map would still be handled correctly.
    """
    mt = mapping_num * target_num
    lm = np.asarray(label_map, dtype=np.float32)
    assert lm.shape[1] == mt
    # G[c, t] = 1/mapping_num if c // mapping_num == t else 0
    g = np.kron(
        np.eye(target_num, dtype=np.float32),
        np.ones((mapping_num, 1), dtype=np.float32),
    ) / float(mapping_num)
    w = lm @ g  # (S, target_num)
    return jnp.asarray(w, dtype=np.asarray(label_map).dtype)


def mapping_layer_forward(prob, mapping_weight, *, batch_tile=512):
    B, S = prob.shape
    T = mapping_weight.shape[1]

    # Batch tiling: either the full batch (always legal), or a multiple-of-8
    # tile so the second-to-last block dim satisfies the (8, 128) rule.
    if B <= batch_tile:
        tb = B
    else:
        tb = batch_tile - (batch_tile % 8)
        tb = max(tb, 8)
    grid = (pl.cdiv(B, tb),)

    cost = pl.CostEstimate(
        flops=2 * B * S * T,
        transcendentals=0,
        bytes_accessed=B * S * 4 + S * T * 4 + B * T * 4,
    )

    return pl.pallas_call(
        mapping_kernel,
        out_shape=jax.ShapeDtypeStruct((B, T), prob.dtype),
        grid=grid,
        in_specs=[
            # prob: tiled over batch; S is the full minor (lane) dim.
            pl.BlockSpec((tb, S), lambda i: (i, 0)),
            # W: small (S, T) weight, resident across the whole grid.
            pl.BlockSpec((S, T), lambda i: (0, 0)),
        ],
        out_specs=pl.BlockSpec((tb, T), lambda i: (i, 0)),
        compiler_params=pltpu.CompilerParams(
            dimension_semantics=("parallel",),
        ),
        cost_estimate=cost,
    )(prob, mapping_weight)


if __name__ == "__main__":
    # Small, module-consistent shapes.
    source_num, mapping_num, target_num = 40, 4, 8   # mt = 32 <= source_num
    batch = 16

    key = jax.random.PRNGKey(0)
    prob = jax.random.uniform(key, (batch, source_num), dtype=jnp.float32)

    label_map = make_label_map(source_num, mapping_num, target_num)
    mapping_weight = make_mapping_weight(label_map, mapping_num, target_num)

    out = mapping_layer_forward(prob, mapping_weight)
    out = jax.block_until_ready(out)

    # Pure-numpy reference of the exact torch semantics.
    map_prob_ref = np.asarray(prob) @ np.asarray(label_map)
    final_ref = map_prob_ref.reshape(batch, target_num, mapping_num).mean(axis=-1)

    assert out.shape == (batch, target_num)
    np.testing.assert_allclose(np.asarray(out), final_ref, rtol=1e-5, atol=1e-5)

    print("KERNEL_OK")
</pallas_src>

<mosaic_0001>
module attributes {stable_mosaic.version = 11 : i64} {
  func.func @mapping_kernel(%arg0: i32, %arg1: memref<16x40xf32, #tpu.memory_space<vmem>>, %arg2: memref<40x8xf32, #tpu.memory_space<vmem>>, %arg3: memref<16x8xf32, #tpu.memory_space<vmem>>) attributes {dimension_semantics = [#tpu.dimension_semantics<parallel>], iteration_bounds = array<i64: 1>, scalar_prefetch = 0 : i64, scratch_operands = 0 : i64, tpu.core_type = #tpu.core_type<tc>, window_params = [{transform_indices = @transform_0, window_bounds = array<i64: 16, 40>}, {pipeline_mode = #tpu.pipeline_mode<synchronous>, transform_indices = @transform_1, window_bounds = array<i64: 40, 8>}, {transform_indices = @transform_2, window_bounds = array<i64: 16, 8>}]} {
    %c0 = arith.constant 0 : index
    %c0_0 = arith.constant 0 : index
    %0 = vector.load %arg1[%c0, %c0_0] : memref<16x40xf32, #tpu.memory_space<vmem>>, vector<16x40xf32>
    %c0_1 = arith.constant 0 : index
    %c0_2 = arith.constant 0 : index
    %1 = vector.load %arg2[%c0_1, %c0_2] : memref<40x8xf32, #tpu.memory_space<vmem>>, vector<40x8xf32>
    %cst = arith.constant dense<0.000000e+00> : vector<16x8xf32>
    %2 = tpu.matmul %0, %1, %cst {dimension_numbers = #tpu.dot_dimension_numbers<[1], [0], [0], [1], [0, 0, 1, 1], [], []>} : vector<16x40xf32>, vector<40x8xf32>, vector<16x8xf32> -> vector<16x8xf32>
    %c0_3 = arith.constant 0 : index
    %c0_4 = arith.constant 0 : index
    %3 = vector.load %arg3[%c0_3, %c0_4] : memref<16x8xf32, #tpu.memory_space<vmem>>, vector<16x8xf32>
    tpu.vector_store %arg3[%c0_3, %c0_4], %2 {strides = array<i32>} : memref<16x8xf32, #tpu.memory_space<vmem>>, vector<16x8xf32>,
    return
  }
  func.func @transform_0(%arg0: i32) -> (i32, i32) {
    %c0_i32 = arith.constant 0 : i32
    %c0_i32_0 = arith.constant 0 : i32
    return %arg0, %c0_i32 : i32, i32
  }
  func.func @transform_1(%arg0: i32) -> (i32, i32) {
    %c0_i32 = arith.constant 0 : i32
    %c0_i32_0 = arith.constant 0 : i32
    %c0_i32_1 = arith.constant 0 : i32
    return %c0_i32, %c0_i32_0 : i32, i32
  }
  func.func @transform_2(%arg0: i32) -> (i32, i32) {
    %c0_i32 = arith.constant 0 : i32
    %c0_i32_0 = arith.constant 0 : i32
    return %arg0, %c0_i32 : i32, i32
  }
}

</mosaic_0001>

<llo_original>
// kernel: tpu_custom_call.1
$region0: #{tpu_custom_call.1}
  #allocation0 [shape = 'u32[]', space=smem, size = 0x4, offset = 0x4, fixed_abs, tag = 'smem constant byte address 0x4 - core index']
  #allocation1 [shape = 'u32[144,128]{1,0:T(1,128)}', space=vmem, size = 0x12000, scoped, tag = 'internal scratch']
  %s0 = inlined_call_operand.vmem [shape: f32[16,40], index: 0, kind: input, shape index: {}]
  %s1 = inlined_call_operand.vmem [shape: f32[40,8], index: 1, kind: input, shape index: {}]
  %s2 = inlined_call_operand.vmem [shape: f32[16,8], index: 2, kind: output, shape index: {}]
  %s3 = sld [smem:[#allocation0]]
  $region18: #{tpu_custom_call.1} parent=0
    _
  %s5 = ssub.s32 1, %s3
  %s6 = scalar_select 0, %s5, %s3
  // Predicated region
  $region2: #{tpu_custom_call.1} parent=0 // pred_check
    _
  $region3: #{tpu_custom_call.1} parent=0 // pred_check_branch
    %8 = sbr.rel (0) target = $region5
  $region4: #{tpu_custom_call.1} parent=0 // pred_region
    _
  $region5: #{tpu_custom_call.1} parent=0 // pred_fallthru
    _
  // Predicated region
  $region6: #{tpu_custom_call.1} parent=0 // pred_check
    _
  $region7: #{tpu_custom_call.1} parent=0 // pred_check_branch
    %10 = sbr.rel (0) target = $region9
  $region8: #{tpu_custom_call.1} parent=0 // pred_region
    _
  $region9: #{tpu_custom_call.1} parent=0 // pred_fallthru
    _
  %v11 = vld [vmem:[%s0] sm:$0xff]
  %v12 = vld [vmem:[%s0 + $0x8] sm:$0xff]
  %v13 = vld [vmem:[%s1] sm:$0xff]
  %v14 = vld [vmem:[%s1 + $0x8] sm:$0xff]
  %v15 = vld [vmem:[%s1 + $0x10] sm:$0xff]
  %v16 = vld [vmem:[%s1 + $0x18] sm:$0xff]
  %v17 = vld [vmem:[%s1 + $0x20] sm:$0xff]
  %vm18 = vcmask 326656
  %v20 = vsel %vm18, %v11, 0
  %v23 = vsel %vm18, %v12, 0
  %25 = vmatprep.subr.mxu0 0.0
  %26 = vmatpush1.msra.mxu0 0.0
  %27 = vmatprep.subr.mxu0 0.0
  %28 = vmatpush1.msra.mxu0 0.0
  %29 = vmatprep.subr.mxu0 0.0
  %30 = vmatpush1.msra.mxu0 0.0
  %31 = vmatprep.subr.mxu0 0.0
  %32 = vmatpush1.msra.mxu0 0.0
  %33 = vmatprep.subr.mxu0 0.0
  %34 = vmatpush1.msra.mxu0 0.0
  %35 = vmatprep.subr.mxu0 0.0
  %36 = vmatpush1.msra.mxu0 0.0
  %37 = vmatprep.subr.mxu0 0.0
  %38 = vmatpush1.msra.mxu0 0.0
  %39 = vmatprep.subr.mxu0 0.0
  %40 = vmatpush1.msra.mxu0 0.0
  %41 = vmatprep.subr.mxu0 0.0
  %42 = vmatpush1.msra.mxu0 0.0
  %43 = vmatprep.subr.mxu0 0.0
  %44 = vmatpush1.msra.mxu0 0.0
  %45 = vmatprep.subr.mxu0 0.0
  %46 = vmatpush1.msra.mxu0 0.0
  %47 = vmatprep.subr.mxu0 0.0
  %48 = vmatpush1.msra.mxu0 %v17
  %49 = vmatprep.subr.mxu0 0.0
  %50 = vmatpush1.msra.mxu0 %v16
  %51 = vmatprep.subr.mxu0 0.0
  %52 = vmatpush1.msra.mxu0 %v15
  %53 = vmatprep.subr.mxu0 0.0
  %54 = vmatpush1.msra.mxu0 %v14
  %55 = vmatprep.subr.mxu0 0.0
  %56 = vmatpush1.msra.mxu0 %v13
  %57 = vmatprep.subr.mxu0 0.0
  %58 = vmatpush2.msra.mxu0 0.0
  %59 = vmatprep.subr.mxu0 0.0
  %60 = vmatpush2.msra.mxu0 0.0
  %61 = vmatprep.subr.mxu0 0.0
  %62 = vmatpush2.msra.mxu0 0.0
  %63 = vmatprep.subr.mxu0 0.0
  %64 = vmatpush2.msra.mxu0 0.0
  %65 = vmatprep.subr.mxu0 0.0
  %66 = vmatpush2.msra.mxu0 0.0
  %67 = vmatprep.subr.mxu0 0.0
  %68 = vmatpush2.msra.mxu0 0.0
  %69 = vmatprep.subr.mxu0 0.0
  %70 = vmatpush2.msra.mxu0 0.0
  %71 = vmatprep.subr.mxu0 0.0
  %72 = vmatpush2.msra.mxu0 0.0
  %73 = vmatprep.subr.mxu0 0.0
  %74 = vmatpush2.msra.mxu0 0.0
  %75 = vmatprep.subr.mxu0 0.0
  %76 = vmatpush2.msra.mxu0 0.0
  %77 = vmatprep.subr.mxu0 0.0
  %78 = vmatpush2.msra.mxu0 0.0
  %79 = vmatprep.subr.mxu0 0.0
  %80 = vmatpush2.msra.mxu0 0.0
  %81 = vmatprep.subr.mxu0 0.0
  %82 = vmatpush2.msra.mxu0 0.0
  %83 = vmatprep.subr.mxu0 0.0
  %84 = vmatpush2.msra.mxu0 0.0
  %85 = vmatprep.subr.mxu0 0.0
  %86 = vmatpush2.msra.mxu0 0.0
  %87 = vmatprep.subr.mxu0 0.0
  %88 = vmatpush2.msra.mxu0 0.0
  %89 = vmatprep.mubr.f32.mxu0 0.0
  %90 = vmatmul.mubr.f32.gmra.mxu0 %v20
  %v91 = vpop.f32.mrf.mxu0
  %v92 = vadd.f32 0.0, %v91
  %v93 = vpop.f32.mrf.mxu0
  %94 = vmatprep.mubr.f32.mxu0 0.0
  %95 = vmatmul.mubr.f32.gmra.mxu0 %v23
  %v96 = vpop.f32.mrf.mxu0
  %v97 = vadd.f32 0.0, %v96
  %v98 = vpop.f32.mrf.mxu0
  %99 = vdwg.mxu0
  %vm100 = vcmask 64512
  %101 = vst.msk [vmem:[%s2] sm:$0xff] %vm100, %v92
  %102 = vst.msk [vmem:[%s2 + $0x8] sm:$0xff] %vm100, %v97
  // Predicated region
  $region10: #{tpu_custom_call.1} parent=0 // pred_check
    _
  $region11: #{tpu_custom_call.1} parent=0 // pred_check_branch
    %104 = sbr.rel (0) target = $region13
  $region12: #{tpu_custom_call.1} parent=0 // pred_region
    _
  $region13: #{tpu_custom_call.1} parent=0 // pred_fallthru
    _
  // Predicated region
  $region14: #{tpu_custom_call.1} parent=0 // pred_check
    _
  $region15: #{tpu_custom_call.1} parent=0 // pred_check_branch
    %106 = sbr.rel (0) target = $region17
  $region16: #{tpu_custom_call.1} parent=0 // pred_region
    _
  $region17: #{tpu_custom_call.1} parent=0 // pred_fallthru
    _

</llo_original>
